<compile_context>
chip_gen: v7x
topology: tpu7x:2x2x1
jax: 0.10.0
libtpu: 0.0.40
codegen_flags: <defaults>
</compile_context>

<pallas_src>
import functools

import jax
import jax.numpy as jnp
from jax import lax
from jax.experimental import pallas as pl
from jax.experimental.pallas import tpu as pltpu

EPS = 1e-5  # nn.BatchNorm2d default


def _round_up(x, m):
    return (x + m - 1) // m * m


# ---------------------------------------------------------------------------
# Phase 1: in-VMEM patch formation + MXU conv + per-image BN partials.
# Refs (leading N dim squeezed by the BlockSpec):
#   x_ref:    (Hq_in, Wq_in, s^2*Cin)  bf16   space-to-depth'd, zero-padded image
#   w_ref:    (Kq, Kq, s^2*Cin, Cp)    bf16   stride-collapsed, zero-padded weights
#   conv_ref: (Hout*Woutp, Cp)         bf16   conv intermediate (downcast of f32 acc)
#   stats_ref:(8, Cp)                  f32    row0 = sum, row1 = M2 (valid cols only)
# ---------------------------------------------------------------------------
def _conv_stats_kernel(x_ref, w_ref, conv_ref, stats_ref, *,
                       kq, hout, wout, woutp):
    cin2 = x_ref.shape[-1]
    cp = conv_ref.shape[-1]

    acc = jnp.zeros((hout * woutp, cp), jnp.float32)
    for qh in range(kq):                       # fully unrolled: Kq^2 MXU matmuls
        for qw in range(kq):
            patch = x_ref[qh:qh + hout, qw:qw + woutp, :]      # contiguous slice
            patch = patch.reshape(hout * woutp, cin2)          # free: woutp % 8 == 0
            acc = acc + jnp.dot(patch, w_ref[qh, qw],
                                preferred_element_type=jnp.float32)

    # BatchNorm partials from the f32 accumulator, BEFORE the bf16 downcast.
    # Only the valid (non width-padded) output columns contribute.
    acc3 = acc.reshape(hout, woutp, cp)                        # free reshape
    col_ok = lax.broadcasted_iota(jnp.int32, (1, woutp, 1), 1) < wout
    valid = jnp.where(col_ok, acc3, 0.0)
    s = jnp.sum(valid, axis=(0, 1), keepdims=True)             # (1, 1, cp)
    mean_i = s * (1.0 / (hout * wout))
    d = jnp.where(col_ok, acc3 - mean_i, 0.0)
    m2 = jnp.sum(d * d, axis=(0, 1), keepdims=True)            # (1, 1, cp)

    stats_ref[...] = jnp.concatenate(
        [s.reshape(1, cp), m2.reshape(1, cp),
         jnp.zeros((6, cp), jnp.float32)], axis=0)
    conv_ref[...] = acc.astype(conv_ref.dtype)


# ---------------------------------------------------------------------------
# Phase 2: y = relu(conv * scale + shift) with per-channel scale/shift.
# ---------------------------------------------------------------------------
def _bn_relu_kernel(conv_ref, scale_ref, shift_ref, o_ref):
    y = conv_ref[...].astype(jnp.float32) * scale_ref[...] + shift_ref[...]
    o_ref[...] = jnp.maximum(y, 0.0)


@functools.partial(jax.jit, static_argnames=("kernel_size", "stride", "mxu_dtype"))
def conv_layer_forward(x_nchw, weight_oihw, bias, gamma, beta, *,
                       kernel_size, stride, mxu_dtype=jnp.bfloat16):
    """Matches ConvLayer.forward for a freshly-constructed (training-mode) module."""
    # The conv bias cancels exactly under training-mode BatchNorm.
    del bias

    n, cin, h, w = x_nchw.shape
    cout = weight_oihw.shape[0]
    k, s = kernel_size, stride
    pad = k // 2

    hout = (h + 2 * pad - k) // s + 1
    wout = (w + 2 * pad - k) // s + 1
    kq = -(-k // s)                       # stride-1 kernel extent after space-to-depth
    woutp = _round_up(wout, 8)            # width padding -> tile-preserving reshapes
    hwp = hout * woutp

    cin2 = s * s * cin                    # stride-collapsed input channels
    cp = _round_up(cout, 128)             # lane-dense output channels
    # (On v6e/v7x with large Cout, rounding cp to 256 fills both MXU halves;
    #  skipped here because Cout is small and the kernel is HBM-bound.)

    hq_in = hout + kq - 1                 # per-image spatial extent after s2d (+halo)
    wq_in = woutp + kq - 1
    hp, wp = s * hq_in, s * wq_in

    # ---- prologue: fused NCHW->NHWC + space-to-depth (single XLA pass over x) ----
    xb = x_nchw.astype(mxu_dtype)
    xb = jnp.pad(xb, ((0, 0), (0, 0),
                      (pad, max(0, hp - h - pad)),
                      (pad, max(0, wp - w - pad))))[:, :, :hp, :wp]
    xb = xb.reshape(n, cin, hq_in, s, wq_in, s)
    xb = jnp.transpose(xb, (0, 2, 4, 3, 5, 1))       # (n, hq, wq, ph, pw, cin)
    x_s2d = xb.reshape(n, hq_in, wq_in, cin2)

    # ---- weights: (Cout,Cin,K,K) -> stride-collapsed (Kq,Kq,s^2*Cin,Cp), zero-padded
    wm = jnp.transpose(weight_oihw, (2, 3, 1, 0))                 # (K,K,Cin,Cout)
    wm = jnp.pad(wm, ((0, s * kq - k), (0, s * kq - k), (0, 0), (0, cp - cout)))
    wm = wm.reshape(kq, s, kq, s, cin, cp)
    wm = jnp.transpose(wm, (0, 2, 1, 3, 4, 5)).reshape(kq, kq, cin2, cp)
    wm = wm.astype(mxu_dtype)

    kern = functools.partial(_conv_stats_kernel, kq=kq, hout=hout,
                             wout=wout, woutp=woutp)
    conv, stats = pl.pallas_call(
        kern,
        out_shape=(jax.ShapeDtypeStruct((n, hwp, cp), mxu_dtype),     # bf16 intermediate
                   jax.ShapeDtypeStruct((n, 8, cp), jnp.float32)),
        grid=(n,),
        in_specs=[
            pl.BlockSpec((None, hq_in, wq_in, cin2), lambda i: (i, 0, 0, 0)),
            pl.BlockSpec((kq, kq, cin2, cp), lambda i: (0, 0, 0, 0)),  # grid-invariant
        ],
        out_specs=(
            pl.BlockSpec((None, hwp, cp), lambda i: (i, 0, 0)),
            pl.BlockSpec((None, 8, cp), lambda i: (i, 0, 0)),
        ),
        compiler_params=pltpu.CompilerParams(dimension_semantics=("parallel",)),
    )(x_s2d, wm)

    # ---- global BatchNorm statistics (training mode, biased variance) ----
    # Chan parallel-variance combine of per-image (sum, M2) partials.
    cnt = hout * wout
    m = n * cnt
    s_i = stats[:, 0, :]                               # (N, Cp)
    m2_i = stats[:, 1, :]
    mean_i = s_i / cnt
    mean = jnp.sum(s_i, axis=0) / m
    var = (jnp.sum(m2_i, axis=0)
           + cnt * jnp.sum((mean_i - mean) ** 2, axis=0)) / m
    var = jnp.maximum(var, 0.0)

    gamma_p = jnp.pad(gamma.astype(jnp.float32), (0, cp - cout))
    beta_p = jnp.pad(beta.astype(jnp.float32), (0, cp - cout))
    scale = gamma_p * lax.rsqrt(var + EPS)
    shift = beta_p - mean * scale

    out = pl.pallas_call(
        _bn_relu_kernel,
        out_shape=jax.ShapeDtypeStruct((n, hwp, cp), jnp.float32),
        grid=(n,),
        in_specs=[
            pl.BlockSpec((None, hwp, cp), lambda i: (i, 0, 0)),
            pl.BlockSpec((1, cp), lambda i: (0, 0)),
            pl.BlockSpec((1, cp), lambda i: (0, 0)),
        ],
        out_specs=pl.BlockSpec((None, hwp, cp), lambda i: (i, 0, 0)),
        compiler_params=pltpu.CompilerParams(dimension_semantics=("parallel",)),
    )(conv, scale.reshape(1, cp), shift.reshape(1, cp))

    # ---- epilogue: drop channel / width padding, back to NCHW (module interface) ----
    out = out[:, :, :cout].reshape(n, hout, woutp, cout)[:, :, :wout, :]
    return jnp.transpose(out, (0, 3, 1, 2))


def _reference(x_nchw, weight_oihw, bias, gamma, beta, kernel_size, stride,
               conv_dtype=jnp.float32):
    """Pure-JAX reference (no Pallas). conv_dtype controls conv-operand precision."""
    padding = kernel_size // 2
    conv = lax.conv_general_dilated(
        x_nchw.astype(conv_dtype), weight_oihw.astype(conv_dtype),
        window_strides=(stride, stride),
        padding=[(padding, padding), (padding, padding)],
        dimension_numbers=("NCHW", "OIHW", "NCHW"),
        preferred_element_type=jnp.float32,
    ) + bias.reshape(1, -1, 1, 1)
    mean = jnp.mean(conv, axis=(0, 2, 3), keepdims=True)
    var = jnp.mean((conv - mean) ** 2, axis=(0, 2, 3), keepdims=True)  # biased
    y = (conv - mean) * lax.rsqrt(var + EPS)
    y = y * gamma.reshape(1, -1, 1, 1) + beta.reshape(1, -1, 1, 1)
    return jnp.maximum(y, 0.0)


if __name__ == "__main__":
    # Small, PyTorch-consistent shapes: NCHW input, Conv2d(in=4, out=8, k=3, stride=2)
    N, CIN, H, W = 2, 4, 16, 16
    COUT, K, STRIDE = 8, 3, 2

    key = jax.random.PRNGKey(0)
    k_x, k_w, k_b = jax.random.split(key, 3)

    x = jax.random.normal(k_x, (N, CIN, H, W), dtype=jnp.float32)
    weight = 0.1 * jax.random.normal(k_w, (COUT, CIN, K, K), dtype=jnp.float32)
    bias = 0.05 * jax.random.normal(k_b, (COUT,), dtype=jnp.float32)
    gamma = jnp.ones((COUT,), dtype=jnp.float32)   # BatchNorm2d default affine init
    beta = jnp.zeros((COUT,), dtype=jnp.float32)

    out = conv_layer_forward(x, weight, bias, gamma, beta,
                             kernel_size=K, stride=STRIDE)
    out = jax.block_until_ready(out)

    assert out.shape == (N, COUT, H // STRIDE, W // STRIDE)

    # Matched-precision check: reference conv also fed bf16 operands, f32 accum.
    # (Kernel additionally stores the conv intermediate in bf16, hence 1e-2.)
    ref_bf16 = _reference(x, weight, bias, gamma, beta, K, STRIDE,
                          conv_dtype=jnp.bfloat16)
    assert jnp.allclose(out, ref_bf16, atol=1e-2, rtol=1e-2), "mismatch vs bf16 ref"

    # Full-f32 reference: tolerance covers bf16 operand + intermediate quantization.
    ref_f32 = _reference(x, weight, bias, gamma, beta, K, STRIDE)
    assert jnp.allclose(out, ref_f32, atol=3e-2, rtol=3e-2), "mismatch vs f32 ref"

    print("KERNEL_OK")
</pallas_src>

<mosaic_0001>
module attributes {stable_mosaic.version = 11 : i64} {
  func.func @_conv_stats_kernel(%arg0: i32, %arg1: memref<1x9x9x16xbf16, #tpu.memory_space<vmem>>, %arg2: memref<2x2x16x128xbf16, #tpu.memory_space<vmem>>, %arg3: memref<1x64x128xbf16, #tpu.memory_space<vmem>>, %arg4: memref<1x8x128xf32, #tpu.memory_space<vmem>>) attributes {dimension_semantics = [#tpu.dimension_semantics<parallel>], iteration_bounds = array<i64: 2>, scalar_prefetch = 0 : i64, scratch_operands = 0 : i64, tpu.core_type = #tpu.core_type<tc>, window_params = [{transform_indices = @transform_0, window_bounds = array<i64: 1, 9, 9, 16>}, {pipeline_mode = #tpu.pipeline_mode<synchronous>, transform_indices = @transform_1, window_bounds = array<i64: 2, 2, 16, 128>}, {transform_indices = @transform_2, window_bounds = array<i64: 1, 64, 128>}, {transform_indices = @transform_3, window_bounds = array<i64: 1, 8, 128>}]} {
    %cst = arith.constant 0.000000e+00 : f32
    %0 = vector.broadcast %cst : f32 to vector<64x128xf32>
    %c0 = arith.constant 0 : index
    %c0_0 = arith.constant 0 : index
    %c0_1 = arith.constant 0 : index
    %c0_2 = arith.constant 0 : index
    %1 = vector.load %arg1[%c0, %c0_0, %c0_1, %c0_2] : memref<1x9x9x16xbf16, #tpu.memory_space<vmem>>, vector<1x8x8x16xbf16>
    %2 = vector.shape_cast %1 : vector<1x8x8x16xbf16> to vector<8x8x16xbf16>
    %3 = vector.shape_cast %2 : vector<8x8x16xbf16> to vector<64x16xbf16>
    %c0_3 = arith.constant 0 : index
    %c0_4 = arith.constant 0 : index
    %c0_5 = arith.constant 0 : index
    %c0_6 = arith.constant 0 : index
    %4 = vector.load %arg2[%c0_3, %c0_4, %c0_5, %c0_6] : memref<2x2x16x128xbf16, #tpu.memory_space<vmem>>, vector<1x1x16x128xbf16>
    %5 = vector.shape_cast %4 : vector<1x1x16x128xbf16> to vector<16x128xbf16>
    %cst_7 = arith.constant dense<0.000000e+00> : vector<64x128xf32>
    %6 = tpu.matmul %3, %5, %cst_7 {dimension_numbers = #tpu.dot_dimension_numbers<[1], [0], [0], [1], [0, 0, 1, 1], [], []>} : vector<64x16xbf16>, vector<16x128xbf16>, vector<64x128xf32> -> vector<64x128xf32>
    %7 = arith.addf %0, %6 : vector<64x128xf32>
    %c0_8 = arith.constant 0 : index
    %c0_9 = arith.constant 0 : index
    %c1 = arith.constant 1 : index
    %c0_10 = arith.constant 0 : index
    %8 = vector.load %arg1[%c0_8, %c0_9, %c1, %c0_10] : memref<1x9x9x16xbf16, #tpu.memory_space<vmem>>, vector<1x8x8x16xbf16>
    %9 = vector.shape_cast %8 : vector<1x8x8x16xbf16> to vector<8x8x16xbf16>
    %10 = vector.shape_cast %9 : vector<8x8x16xbf16> to vector<64x16xbf16>
    %c0_11 = arith.constant 0 : index
    %c1_12 = arith.constant 1 : index
    %c0_13 = arith.constant 0 : index
    %c0_14 = arith.constant 0 : index
    %11 = vector.load %arg2[%c0_11, %c1_12, %c0_13, %c0_14] : memref<2x2x16x128xbf16, #tpu.memory_space<vmem>>, vector<1x1x16x128xbf16>
    %12 = vector.shape_cast %11 : vector<1x1x16x128xbf16> to vector<16x128xbf16>
    %cst_15 = arith.constant dense<0.000000e+00> : vector<64x128xf32>
    %13 = tpu.matmul %10, %12, %cst_15 {dimension_numbers = #tpu.dot_dimension_numbers<[1], [0], [0], [1], [0, 0, 1, 1], [], []>} : vector<64x16xbf16>, vector<16x128xbf16>, vector<64x128xf32> -> vector<64x128xf32>
    %14 = arith.addf %7, %13 : vector<64x128xf32>
    %c0_16 = arith.constant 0 : index
    %c1_17 = arith.constant 1 : index
    %c0_18 = arith.constant 0 : index
    %c0_19 = arith.constant 0 : index
    %15 = vector.load %arg1[%c0_16, %c1_17, %c0_18, %c0_19] : memref<1x9x9x16xbf16, #tpu.memory_space<vmem>>, vector<1x8x8x16xbf16>
    %16 = vector.shape_cast %15 : vector<1x8x8x16xbf16> to vector<8x8x16xbf16>
    %17 = vector.shape_cast %16 : vector<8x8x16xbf16> to vector<64x16xbf16>
    %c1_20 = arith.constant 1 : index
    %c0_21 = arith.constant 0 : index
    %c0_22 = arith.constant 0 : index
    %c0_23 = arith.constant 0 : index
    %18 = vector.load %arg2[%c1_20, %c0_21, %c0_22, %c0_23] : memref<2x2x16x128xbf16, #tpu.memory_space<vmem>>, vector<1x1x16x128xbf16>
    %19 = vector.shape_cast %18 : vector<1x1x16x128xbf16> to vector<16x128xbf16>
    %cst_24 = arith.constant dense<0.000000e+00> : vector<64x128xf32>
    %20 = tpu.matmul %17, %19, %cst_24 {dimension_numbers = #tpu.dot_dimension_numbers<[1], [0], [0], [1], [0, 0, 1, 1], [], []>} : vector<64x16xbf16>, vector<16x128xbf16>, vector<64x128xf32> -> vector<64x128xf32>
    %21 = arith.addf %14, %20 : vector<64x128xf32>
    %c0_25 = arith.constant 0 : index
    %c1_26 = arith.constant 1 : index
    %c1_27 = arith.constant 1 : index
    %c0_28 = arith.constant 0 : index
    %22 = vector.load %arg1[%c0_25, %c1_26, %c1_27, %c0_28] : memref<1x9x9x16xbf16, #tpu.memory_space<vmem>>, vector<1x8x8x16xbf16>
    %23 = vector.shape_cast %22 : vector<1x8x8x16xbf16> to vector<8x8x16xbf16>
    %24 = vector.shape_cast %23 : vector<8x8x16xbf16> to vector<64x16xbf16>
    %c1_29 = arith.constant 1 : index
    %c1_30 = arith.constant 1 : index
    %c0_31 = arith.constant 0 : index
    %c0_32 = arith.constant 0 : index
    %25 = vector.load %arg2[%c1_29, %c1_30, %c0_31, %c0_32] : memref<2x2x16x128xbf16, #tpu.memory_space<vmem>>, vector<1x1x16x128xbf16>
    %26 = vector.shape_cast %25 : vector<1x1x16x128xbf16> to vector<16x128xbf16>
    %cst_33 = arith.constant dense<0.000000e+00> : vector<64x128xf32>
    %27 = tpu.matmul %24, %26, %cst_33 {dimension_numbers = #tpu.dot_dimension_numbers<[1], [0], [0], [1], [0, 0, 1, 1], [], []>} : vector<64x16xbf16>, vector<16x128xbf16>, vector<64x128xf32> -> vector<64x128xf32>
    %28 = arith.addf %21, %27 : vector<64x128xf32>
    %29 = vector.shape_cast %28 : vector<64x128xf32> to vector<8x8x128xf32>
    %30 = tpu.iota {dimensions = array<i32: 1>} : vector<1x8x1xi32>
    %c8_i32 = arith.constant 8 : i32
    %31 = vector.broadcast %c8_i32 : i32 to vector<1x8x1xi32>
    %32 = arith.cmpi slt, %30, %31 : vector<1x8x1xi32>
    %cst_34 = arith.constant 0.000000e+00 : f32
    %33 = vector.shape_cast %32 : vector<1x8x1xi1> to vector<1x8x1xi1>
    %34 = vector.broadcast %33 : vector<1x8x1xi1> to vector<8x8x128xi1>
    %35 = vector.broadcast %cst_34 : f32 to vector<8x8x128xf32>
    %36 = arith.select %34, %29, %35 : vector<8x8x128xi1>, vector<8x8x128xf32>
    %cst_35 = arith.constant dense<0.000000e+00> : vector<128xf32>
    %37 = vector.multi_reduction <add>, %36, %cst_35 [0, 1] : vector<8x8x128xf32> to vector<128xf32>
    %38 = vector.shape_cast %37 : vector<128xf32> to vector<1x1x128xf32>
    %cst_36 = arith.constant 1.562500e-02 : f32
    %39 = vector.broadcast %cst_36 : f32 to vector<1x1x128xf32>
    %40 = arith.mulf %38, %39 : vector<1x1x128xf32>
    %41 = vector.broadcast %40 : vector<1x1x128xf32> to vector<8x8x128xf32>
    %42 = arith.subf %29, %41 : vector<8x8x128xf32>
    %cst_37 = arith.constant 0.000000e+00 : f32
    %43 = vector.shape_cast %32 : vector<1x8x1xi1> to vector<1x8x1xi1>
    %44 = vector.broadcast %43 : vector<1x8x1xi1> to vector<8x8x128xi1>
    %45 = vector.broadcast %cst_37 : f32 to vector<8x8x128xf32>
    %46 = arith.select %44, %42, %45 : vector<8x8x128xi1>, vector<8x8x128xf32>
    %47 = arith.mulf %46, %46 : vector<8x8x128xf32>
    %cst_38 = arith.constant dense<0.000000e+00> : vector<128xf32>
    %48 = vector.multi_reduction <add>, %47, %cst_38 [0, 1] : vector<8x8x128xf32> to vector<128xf32>
    %49 = vector.shape_cast %48 : vector<128xf32> to vector<1x1x128xf32>
    %50 = vector.shape_cast %38 : vector<1x1x128xf32> to vector<1x128xf32>
    %51 = vector.shape_cast %49 : vector<1x1x128xf32> to vector<1x128xf32>
    %cst_39 = arith.constant 0.000000e+00 : f32
    %52 = vector.broadcast %cst_39 : f32 to vector<6x128xf32>
    %53 = tpu.concatenate %50, %51, %52 in 0 : vector<1x128xf32>, vector<1x128xf32>, vector<6x128xf32> -> vector<8x128xf32>
    %c0_40 = arith.constant 0 : index
    %c0_41 = arith.constant 0 : index
    %c0_42 = arith.constant 0 : index
    %54 = vector.load %arg4[%c0_40, %c0_41, %c0_42] : memref<1x8x128xf32, #tpu.memory_space<vmem>>, vector<1x8x128xf32>
    %55 = vector.shape_cast %54 : vector<1x8x128xf32> to vector<8x128xf32>
    %56 = vector.shape_cast %53 : vector<8x128xf32> to vector<1x8x128xf32>
    tpu.vector_store %arg4[%c0_40, %c0_41, %c0_42], %56 {strides = array<i32>} : memref<1x8x128xf32, #tpu.memory_space<vmem>>, vector<1x8x128xf32>,
    %57 = arith.truncf %28 : vector<64x128xf32> to vector<64x128xbf16>
    %c0_43 = arith.constant 0 : index
    %c0_44 = arith.constant 0 : index
    %c0_45 = arith.constant 0 : index
    %58 = vector.load %arg3[%c0_43, %c0_44, %c0_45] : memref<1x64x128xbf16, #tpu.memory_space<vmem>>, vector<1x64x128xbf16>
    %59 = vector.shape_cast %58 : vector<1x64x128xbf16> to vector<64x128xbf16>
    %60 = vector.shape_cast %57 : vector<64x128xbf16> to vector<1x64x128xbf16>
    tpu.vector_store %arg3[%c0_43, %c0_44, %c0_45], %60 {strides = array<i32>} : memref<1x64x128xbf16, #tpu.memory_space<vmem>>, vector<1x64x128xbf16>,
    return
  }
  func.func @transform_0(%arg0: i32) -> (i32, i32, i32, i32) {
    %c0_i32 = arith.constant 0 : i32
    %c0_i32_0 = arith.constant 0 : i32
    %c0_i32_1 = arith.constant 0 : i32
    %c0_i32_2 = arith.constant 0 : i32
    return %arg0, %c0_i32, %c0_i32_0, %c0_i32_1 : i32, i32, i32, i32
  }
  func.func @transform_1(%arg0: i32) -> (i32, i32, i32, i32) {
    %c0_i32 = arith.constant 0 : i32
    %c0_i32_0 = arith.constant 0 : i32
    %c0_i32_1 = arith.constant 0 : i32
    %c0_i32_2 = arith.constant 0 : i32
    %c0_i32_3 = arith.constant 0 : i32
    return %c0_i32, %c0_i32_0, %c0_i32_1, %c0_i32_2 : i32, i32, i32, i32
  }
  func.func @transform_2(%arg0: i32) -> (i32, i32, i32) {
    %c0_i32 = arith.constant 0 : i32
    %c0_i32_0 = arith.constant 0 : i32
    %c0_i32_1 = arith.constant 0 : i32
    return %arg0, %c0_i32, %c0_i32_0 : i32, i32, i32
  }
  func.func @transform_3(%arg0: i32) -> (i32, i32, i32) {
    %c0_i32 = arith.constant 0 : i32
    %c0_i32_0 = arith.constant 0 : i32
    %c0_i32_1 = arith.constant 0 : i32
    return %arg0, %c0_i32, %c0_i32_0 : i32, i32, i32
  }
}

module attributes {stable_mosaic.version = 11 : i64} {
  func.func @_bn_relu_kernel(%arg0: i32, %arg1: memref<1x64x128xbf16, #tpu.memory_space<vmem>>, %arg2: memref<1x128xf32, #tpu.memory_space<vmem>>, %arg3: memref<1x128xf32, #tpu.memory_space<vmem>>, %arg4: memref<1x64x128xf32, #tpu.memory_space<vmem>>) attributes {dimension_semantics = [#tpu.dimension_semantics<parallel>], iteration_bounds = array<i64: 2>, scalar_prefetch = 0 : i64, scratch_operands = 0 : i64, tpu.core_type = #tpu.core_type<tc>, window_params = [{transform_indices = @transform_0, window_bounds = array<i64: 1, 64, 128>}, {pipeline_mode = #tpu.pipeline_mode<synchronous>, transform_indices = @transform_1, window_bounds = array<i64: 1, 128>}, {pipeline_mode = #tpu.pipeline_mode<synchronous>, transform_indices = @transform_2, window_bounds = array<i64: 1, 128>}, {transform_indices = @transform_3, window_bounds = array<i64: 1, 64, 128>}]} {
    %c0 = arith.constant 0 : index
    %c0_0 = arith.constant 0 : index
    %c0_1 = arith.constant 0 : index
    %0 = vector.load %arg1[%c0, %c0_0, %c0_1] : memref<1x64x128xbf16, #tpu.memory_space<vmem>>, vector<1x64x128xbf16>
    %1 = vector.shape_cast %0 : vector<1x64x128xbf16> to vector<64x128xbf16>
    %2 = arith.extf %1 : vector<64x128xbf16> to vector<64x128xf32>
    %c0_2 = arith.constant 0 : index
    %c0_3 = arith.constant 0 : index
    %3 = vector.load %arg2[%c0_2, %c0_3] : memref<1x128xf32, #tpu.memory_space<vmem>>, vector<1x128xf32>
    %4 = vector.broadcast %3 : vector<1x128xf32> to vector<64x128xf32>
    %5 = arith.mulf %2, %4 : vector<64x128xf32>
    %c0_4 = arith.constant 0 : index
    %c0_5 = arith.constant 0 : index
    %6 = vector.load %arg3[%c0_4, %c0_5] : memref<1x128xf32, #tpu.memory_space<vmem>>, vector<1x128xf32>
    %7 = vector.broadcast %6 : vector<1x128xf32> to vector<64x128xf32>
    %8 = arith.addf %5, %7 : vector<64x128xf32>
    %cst = arith.constant 0.000000e+00 : f32
    %9 = vector.broadcast %cst : f32 to vector<64x128xf32>
    %10 = arith.maximumf %8, %9 : vector<64x128xf32>
    %c0_6 = arith.constant 0 : index
    %c0_7 = arith.constant 0 : index
    %c0_8 = arith.constant 0 : index
    %11 = vector.load %arg4[%c0_6, %c0_7, %c0_8] : memref<1x64x128xf32, #tpu.memory_space<vmem>>, vector<1x64x128xf32>
    %12 = vector.shape_cast %11 : vector<1x64x128xf32> to vector<64x128xf32>
    %13 = vector.shape_cast %10 : vector<64x128xf32> to vector<1x64x128xf32>
    tpu.vector_store %arg4[%c0_6, %c0_7, %c0_8], %13 {strides = array<i32>} : memref<1x64x128xf32, #tpu.memory_space<vmem>>, vector<1x64x128xf32>,
    return
  }
  func.func @transform_0(%arg0: i32) -> (i32, i32, i32) {
    %c0_i32 = arith.constant 0 : i32
    %c0_i32_0 = arith.constant 0 : i32
    %c0_i32_1 = arith.constant 0 : i32
    return %arg0, %c0_i32, %c0_i32_0 : i32, i32, i32
  }
  func.func @transform_1(%arg0: i32) -> (i32, i32) {
    %c0_i32 = arith.constant 0 : i32
    %c0_i32_0 = arith.constant 0 : i32
    %c0_i32_1 = arith.constant 0 : i32
    return %c0_i32, %c0_i32_0 : i32, i32
  }
  func.func @transform_2(%arg0: i32) -> (i32, i32) {
    %c0_i32 = arith.constant 0 : i32
    %c0_i32_0 = arith.constant 0 : i32
    %c0_i32_1 = arith.constant 0 : i32
    return %c0_i32, %c0_i32_0 : i32, i32
  }
  func.func @transform_3(%arg0: i32) -> (i32, i32, i32) {
    %c0_i32 = arith.constant 0 : i32
    %c0_i32_0 = arith.constant 0 : i32
    %c0_i32_1 = arith.constant 0 : i32
    return %arg0, %c0_i32, %c0_i32_0 : i32, i32, i32
  }
}

</mosaic_0001>

<llo_original>
// kernel: conv_layer_forward.3
$region0: #{conv_layer_forward.3}
  #allocation0 [shape = 'u32[]', space=smem, size = 0x4, offset = 0x4, fixed_abs, tag = 'smem constant byte address 0x4 - core index']
  #allocation1 [shape = 'u32[144,128]{1,0:T(1,128)}', space=vmem, size = 0x12000, scoped, tag = 'internal scratch']
  %s0 = inlined_call_operand.vmem [shape: bf16[2,64,128], index: 0, kind: input, shape index: {}]
  %s1 = inlined_call_operand.vmem [shape: f32[1,128], index: 1, kind: input, shape index: {}]
  %s2 = inlined_call_operand.vmem [shape: f32[1,128], index: 2, kind: input, shape index: {}]
  %s3 = inlined_call_operand.vmem [shape: f32[2,64,128], index: 3, kind: output, shape index: {}]
  %s4 = sld [smem:[#allocation0]]
  $region45: #{conv_layer_forward.3} parent=0
    _
  %s6 = ssub.s32 1, %s4
  %s7 = scalar_select 0, %s6, %s4
  loop: start=0, step=1, limit=4
  $region2: #{conv_layer_forward.3} parent=0 // loop_pre_header
    _
  $region3: #{conv_layer_forward.3} parent=0 // loop_header
    %s9 = sphi 0, %s13
    %p10 = scmp.ge.s32.totalorder %s9, 4
    %s19 = sphi 0, %s21
    %s22 = sphi 0, %s19
    %s23 = sphi 0, %s22
    %s39 = sphi 0, %s23
    %s43 = sphi 0, %s43
    %s45 = sphi 0, %s43
    %s46 = sphi 0, %s45
    %s60 = sphi 0, %s46
    %s64 = sphi 0, %s64
    %s66 = sphi 0, %s64
    %s67 = sphi 0, %s66
    %s81 = sphi 0, %s67
    %s87 = sphi 0, %s89
    %s90 = sphi 0, %s87
    %s91 = sphi 0, %s90
    %s107 = sphi 0, %s91
  $region4: #{conv_layer_forward.3} parent=0 // loop_header_branch
    %12 = sbr.rel (%p10) target = $region8
  $region5: #{conv_layer_forward.3} parent=0 // loop_body
    %s14 = ssub.s32 %s9, 1
    %s15 = ssub.s32 %s9, 2
    %s16 = sadd.s32 %s9, 1
    %s17 = ssub.s32 %s9, %s16
    %p18 = scmp.eq.s32.totalorder %s17, 0
    %s20 = sadd.s32 %s19, 1
    %s21 = scalar_select %p18, %s19, %s20
    %p24 = pneg %p18
    %p25 = scmp.eq.s32.totalorder %s9, 1
    %p26 = por %p24, %p25
    %p27 = scmp.ne.s32.totalorder %s19, %s22
    %p28 = scmp.eq.s32.totalorder %s9, 0
    %p29 = por %p27, %p28
    %p30 = scmp.ne.s32.totalorder %s19, %s22
    %p31 = scmp.eq.s32.totalorder %s14, 1
    %p32 = por %p30, %p31
    %p33 = scmp.ne.s32.totalorder %s22, %s23
    %p34 = scmp.eq.s32.totalorder %s14, 0
    %p35 = por %p33, %p34
    %p36 = scmp.ne.s32.totalorder %s22, %s23
    %p37 = scmp.eq.s32.totalorder %s15, 1
    %p38 = por %p36, %p37
    %p40 = scmp.ne.s32.totalorder %s23, %s39
    %p41 = scmp.eq.s32.totalorder %s15, 0
    %p42 = por %p40, %p41
    %s44 = sadd.s32 %s43, 1
    %p47 = scmp.eq.s32.totalorder %s9, 1
    %p48 = scmp.ne.s32.totalorder %s43, %s45
    %p49 = scmp.eq.s32.totalorder %s9, 0
    %p50 = por %p48, %p49
    %p51 = scmp.ne.s32.totalorder %s43, %s45
    %p52 = scmp.eq.s32.totalorder %s14, 1
    %p53 = por %p51, %p52
    %p54 = scmp.ne.s32.totalorder %s45, %s46
    %p55 = scmp.eq.s32.totalorder %s14, 0
    %p56 = por %p54, %p55
    %p57 = scmp.ne.s32.totalorder %s45, %s46
    %p58 = scmp.eq.s32.totalorder %s15, 1
    %p59 = por %p57, %p58
    %p61 = scmp.ne.s32.totalorder %s46, %s60
    %p62 = scmp.eq.s32.totalorder %s15, 0
    %p63 = por %p61, %p62
    %s65 = sadd.s32 %s64, 1
    %p68 = scmp.eq.s32.totalorder %s9, 1
    %p69 = scmp.ne.s32.totalorder %s64, %s66
    %p70 = scmp.eq.s32.totalorder %s9, 0
    %p71 = por %p69, %p70
    %p72 = scmp.ne.s32.totalorder %s64, %s66
    %p73 = scmp.eq.s32.totalorder %s14, 1
    %p74 = por %p72, %p73
    %p75 = scmp.ne.s32.totalorder %s66, %s67
    %p76 = scmp.eq.s32.totalorder %s14, 0
    %p77 = por %p75, %p76
    %p78 = scmp.ne.s32.totalorder %s66, %s67
    %p79 = scmp.eq.s32.totalorder %s15, 1
    %p80 = por %p78, %p79
    %p82 = scmp.ne.s32.totalorder %s67, %s81
    %p83 = scmp.eq.s32.totalorder %s15, 0
    %p84 = por %p82, %p83
    %s85 = ssub.s32 %s9, %s16
    %p86 = scmp.eq.s32.totalorder %s85, 0
    %s88 = sadd.s32 %s87, 1
    %s89 = scalar_select %p86, %s87, %s88
    %p92 = pneg %p86
    %p93 = scmp.eq.s32.totalorder %s9, 1
    %p94 = por %p92, %p93
    %p95 = scmp.ne.s32.totalorder %s87, %s90
    %p96 = scmp.eq.s32.totalorder %s9, 0
    %p97 = por %p95, %p96
    %p98 = scmp.ne.s32.totalorder %s87, %s90
    %p99 = scmp.eq.s32.totalorder %s14, 1
    %p100 = por %p98, %p99
    %p101 = scmp.ne.s32.totalorder %s90, %s91
    %p102 = scmp.eq.s32.totalorder %s14, 0
    %p103 = por %p101, %p102
    %p104 = scmp.ne.s32.totalorder %s90, %s91
    %p105 = scmp.eq.s32.totalorder %s15, 1
    %p106 = por %p104, %p105
    %p108 = scmp.ne.s32.totalorder %s91, %s107
    %p109 = scmp.eq.s32.totalorder %s15, 0
    %p110 = por %p108, %p109
    %p111 = scmp.le.s32.totalorder 1, %s9
    %p112 = scmp.lt.s32.totalorder %s9, 3
    %p113 = pnand %p111, %p112
    %p114 = pneg %p113
    // Predicated region
    $region9: #{conv_layer_forward.3} parent=5 // pred_check
      _
    $region10: #{conv_layer_forward.3} parent=5 // pred_check_branch
      %116 = sbr.rel (%p113) target = $region12
    $region11: #{conv_layer_forward.3} parent=5 // pred_region
      %s117 = ssub.s32 %s9, 1
      // Predicated region
      $region13: #{conv_layer_forward.3} parent=11 // pred_check
        %p118 = pneg %p56
      $region14: #{conv_layer_forward.3} parent=11 // pred_check_branch
        %120 = sbr.rel (%p118) target = $region16
      $region15: #{conv_layer_forward.3} parent=11 // pred_region
        _
      $region16: #{conv_layer_forward.3} parent=11 // pred_fallthru
        _
      // Predicated region
      $region17: #{conv_layer_forward.3} parent=11 // pred_check
        %p121 = pneg %p77
      $region18: #{conv_layer_forward.3} parent=11 // pred_check_branch
        %123 = sbr.rel (%p121) target = $region20
      $region19: #{conv_layer_forward.3} parent=11 // pred_region
        _
      $region20: #{conv_layer_forward.3} parent=11 // pred_fallthru
        _
    $region12: #{conv_layer_forward.3} parent=5 // pred_fallthru
      _
    %p124 = scmp.lt.s32.totalorder %s9, 2
    // Predicated region
    $region21: #{conv_layer_forward.3} parent=5 // pred_check
      %p125 = pneg %p124
    $region22: #{conv_layer_forward.3} parent=5 // pred_check_branch
      %127 = sbr.rel (%p125) target = $region24
    $region23: #{conv_layer_forward.3} parent=5 // pred_region
      // Predicated region
      $region25: #{conv_layer_forward.3} parent=23 // pred_check
        %p128 = pneg %p29
      $region26: #{conv_layer_forward.3} parent=23 // pred_check_branch
        %130 = sbr.rel (%p128) target = $region28
      $region27: #{conv_layer_forward.3} parent=23 // pred_region
        %p131 = scmp.lt.s32.totalorder %s9, 1
        %s132 = scalar_select %p131, %s9, 1
        %s133 = smul.addr %s132, 8
        %s134 = smul.addr %s133, 4
        %s135 = scalar_lea.vmem %s0, %s134
      $region28: #{conv_layer_forward.3} parent=23 // pred_fallthru
        _
    $region24: #{conv_layer_forward.3} parent=5 // pred_fallthru
      _
    %p136 = scmp.le.s32.totalorder 1, %s9
    %p137 = scmp.lt.s32.totalorder %s9, 3
    %p138 = pnand %p136, %p137
    %p139 = pneg %p138
    // Predicated region
    $region29: #{conv_layer_forward.3} parent=5 // pred_check
      _
    $region30: #{conv_layer_forward.3} parent=5 // pred_check_branch
      %141 = sbr.rel (%p138) target = $region32
    $region31: #{conv_layer_forward.3} parent=5 // pred_region
      %s142 = ssub.s32 %s9, 1
      %p143 = scmp.lt.s32.totalorder %s14, 1
      %s144 = scalar_select %p143, %s14, 1
      %s145 = smul.addr %s144, 8
      %s146 = smul.addr %s145, 4
      %s147 = scalar_lea.vmem %s0, %s146
      %p148 = pneg %p35
      %p149 = pneg %p32
      %p150 = pneg %p56
      %p151 = pneg %p53
      %p152 = pneg %p77
      %p153 = pneg %p74
      %p154 = pneg %p103
      %p155 = pneg %p100
      %p156 = scmp.lt.s32.totalorder %s14, 1
      %s157 = scalar_select %p156, %s14, 1
      %s158 = smul.addr %s157, 8
      %s159 = smul.addr %s158, 8
      %s160 = scalar_lea.vmem %s3, %s159
      %p161 = scmp.lt.s32.totalorder %s14, 1
      %s162 = scalar_select %p161, %s14, 1
      %s163 = smul.addr %s162, 8
      %s164 = smul.addr %s163, 4
      %s165 = scalar_lea.vmem %s0, %s164
      %p166 = scmp.lt.s32.totalorder %s14, 1
      %s167 = scalar_select %p166, %s14, 1
      %s168 = smul.addr %s167, 8
      %s169 = smul.addr %s168, 8
      %s170 = scalar_lea.vmem %s3, %s169
      %v171 = vld [vmem:[%s165] sm:$0xf]
      %v172 = vld [vmem:[%s165 + $0x4] sm:$0xf]
      %v173 = vld [vmem:[%s165 + $0x8] sm:$0xf]
      %v174 = vld [vmem:[%s165 + $0xc] sm:$0xf]
      %v175 = vld [vmem:[%s165 + $0x10] sm:$0xf]
      %v176 = vld [vmem:[%s165 + $0x14] sm:$0xf]
      %v177 = vld [vmem:[%s165 + $0x18] sm:$0xf]
      %v178 = vld [vmem:[%s165 + $0x1c] sm:$0xf]
      %v179 = vunpack.c.l.bf16 %v171
      %v180 = vunpack.c.l.bf16 %v172
      %v181 = vunpack.c.l.bf16 %v173
      %v182 = vunpack.c.l.bf16 %v174
      %v183 = vunpack.c.l.bf16 %v175
      %v184 = vunpack.c.l.bf16 %v176
      %v185 = vunpack.c.l.bf16 %v177
      %v186 = vunpack.c.l.bf16 %v178
      %v187 = vld [vmem:[%s1] sm:$0x1]
      %v189 = vlaneseq
      %v190 = vshrl.u32 %v189, 7
      %v191 = vsub.s32 0, %v190
      %v192 = vrot.slane %v187, %v191
      %v194 = vmul.f32 %v179, %v192
      %v195 = vmul.f32 %v180, %v192
      %v196 = vmul.f32 %v181, %v192
      %v197 = vmul.f32 %v182, %v192
      %v198 = vmul.f32 %v183, %v192
      %v199 = vmul.f32 %v184, %v192
      %v200 = vmul.f32 %v185, %v192
      %v201 = vmul.f32 %v186, %v192
      %v202 = vld [vmem:[%s2] sm:$0x1]
      %v204 = vlaneseq
      %v205 = vshrl.u32 %v204, 7
      %v206 = vsub.s32 0, %v205
      %v207 = vrot.slane %v202, %v206
      %v209 = vadd.f32 %v194, %v207
      %v210 = vadd.f32 %v195, %v207
      %v211 = vadd.f32 %v196, %v207
      %v212 = vadd.f32 %v197, %v207
      %v213 = vadd.f32 %v198, %v207
      %v214 = vadd.f32 %v199, %v207
      %v215 = vadd.f32 %v200, %v207
      %v216 = vadd.f32 %v201, %v207
      %v217 = vmax.f32 %v209, 0.0
      %v218 = vmax.f32 %v210, 0.0
      %v219 = vmax.f32 %v211, 0.0
      %v220 = vmax.f32 %v212, 0.0
      %v221 = vmax.f32 %v213, 0.0
      %v222 = vmax.f32 %v214, 0.0
      %v223 = vmax.f32 %v215, 0.0
      %v224 = vmax.f32 %v216, 0.0
      %225 = vst [vmem:[%s170] sm:$0xff] %v217
      %226 = vst [vmem:[%s170 + $0x8] sm:$0xff] %v218
      %227 = vst [vmem:[%s170 + $0x10] sm:$0xff] %v219
      %228 = vst [vmem:[%s170 + $0x18] sm:$0xff] %v220
      %229 = vst [vmem:[%s170 + $0x20] sm:$0xff] %v221
      %230 = vst [vmem:[%s170 + $0x28] sm:$0xff] %v222
      %231 = vst [vmem:[%s170 + $0x30] sm:$0xff] %v223
      %232 = vst [vmem:[%s170 + $0x38] sm:$0xff] %v224
      %p233 = scmp.lt.s32.totalorder %s14, 1
      %s234 = scalar_select %p233, %s14, 1
      %s235 = smul.addr %s234, 8
      %s236 = smul.addr %s235, 8
      %s237 = scalar_lea.vmem %s3, %s236
      // Predicated region
      $region33: #{conv_layer_forward.3} parent=31 // pred_check
        %p238 = pneg %p100
      $region34: #{conv_layer_forward.3} parent=31 // pred_check_branch
        %240 = sbr.rel (%p238) target = $region36
      $region35: #{conv_layer_forward.3} parent=31 // pred_region
        _
      $region36: #{conv_layer_forward.3} parent=31 // pred_fallthru
        _
    $region32: #{conv_layer_forward.3} parent=5 // pred_fallthru
      _
    %p241 = scmp.le.s32.totalorder 2, %s9
    // Predicated region
    $region37: #{conv_layer_forward.3} parent=5 // pred_check
      %p242 = pneg %p241
    $region38: #{conv_layer_forward.3} parent=5 // pred_check_branch
      %244 = sbr.rel (%p242) target = $region40
    $region39: #{conv_layer_forward.3} parent=5 // pred_region
      %s245 = ssub.s32 %s9, 2
      // Predicated region
      $region41: #{conv_layer_forward.3} parent=39 // pred_check
        %p246 = pneg %p106
      $region42: #{conv_layer_forward.3} parent=39 // pred_check_branch
        %248 = sbr.rel (%p246) target = $region44
      $region43: #{conv_layer_forward.3} parent=39 // pred_region
        %p249 = scmp.lt.s32.totalorder %s15, 1
        %s250 = scalar_select %p249, %s15, 1
        %s251 = smul.addr %s250, 8
        %s252 = smul.addr %s251, 8
        %s253 = scalar_lea.vmem %s3, %s252
      $region44: #{conv_layer_forward.3} parent=39 // pred_fallthru
        _
    $region40: #{conv_layer_forward.3} parent=5 // pred_fallthru
      _
  $region6: #{conv_layer_forward.3} parent=0 // loop_footer
    %s13 = sadd.s32 1, %s9
  $region7: #{conv_layer_forward.3} parent=0 // loop_footer_branch
    %8 = sbr.rel target = $region3
  $region8: #{conv_layer_forward.3} parent=0 // loop_exit
    _

// kernel: conv_layer_forward.2
$region0: #{conv_layer_forward.2}
  #allocation0 [shape = 'u32[]', space=smem, size = 0x4, offset = 0x4, fixed_abs, tag = 'smem constant byte address 0x4 - core index']
  #allocation1 [shape = 'u32[144,128]{1,0:T(1,128)}', space=vmem, size = 0x12000, scoped, tag = 'internal scratch']
  %s0 = inlined_call_operand.vmem [shape: bf16[2,9,9,16], index: 0, kind: input, shape index: {}]
  %s1 = inlined_call_operand.vmem [shape: bf16[2,2,16,128], index: 1, kind: input, shape index: {}]
  %s2 = inlined_call_operand.vmem [shape: bf16[2,64,128], index: 2, kind: output, shape index: {0}]
  %s3 = inlined_call_operand.vmem [shape: f32[2,8,128], index: 3, kind: output, shape index: {1}]
  %4 = xla_tuple %s2, %s3
  %s5 = sld [smem:[#allocation0]]
  $region49: #{conv_layer_forward.2} parent=0
    _
  %s7 = ssub.s32 1, %s5
  %s8 = scalar_select 0, %s7, %s5
  loop: start=0, step=1, limit=4
  $region2: #{conv_layer_forward.2} parent=0 // loop_pre_header
    _
  $region3: #{conv_layer_forward.2} parent=0 // loop_header
    %s10 = sphi 0, %s14
    %p11 = scmp.ge.s32.totalorder %s10, 4
    %s20 = sphi 0, %s22
    %s23 = sphi 0, %s20
    %s24 = sphi 0, %s23
    %s40 = sphi 0, %s24
    %s44 = sphi 0, %s44
    %s46 = sphi 0, %s44
    %s47 = sphi 0, %s46
    %s61 = sphi 0, %s47
    %s67 = sphi 0, %s69
    %s70 = sphi 0, %s67
    %s71 = sphi 0, %s70
    %s87 = sphi 0, %s71
    %s93 = sphi 0, %s95
    %s96 = sphi 0, %s93
    %s97 = sphi 0, %s96
    %s113 = sphi 0, %s97
  $region4: #{conv_layer_forward.2} parent=0 // loop_header_branch
    %13 = sbr.rel (%p11) target = $region8
  $region5: #{conv_layer_forward.2} parent=0 // loop_body
    %s15 = ssub.s32 %s10, 1
    %s16 = ssub.s32 %s10, 2
    %s17 = sadd.s32 %s10, 1
    %s18 = ssub.s32 %s10, %s17
    %p19 = scmp.eq.s32.totalorder %s18, 0
    %s21 = sadd.s32 %s20, 1
    %s22 = scalar_select %p19, %s20, %s21
    %p25 = pneg %p19
    %p26 = scmp.eq.s32.totalorder %s10, 1
    %p27 = por %p25, %p26
    %p28 = scmp.ne.s32.totalorder %s20, %s23
    %p29 = scmp.eq.s32.totalorder %s10, 0
    %p30 = por %p28, %p29
    %p31 = scmp.ne.s32.totalorder %s20, %s23
    %p32 = scmp.eq.s32.totalorder %s15, 1
    %p33 = por %p31, %p32
    %p34 = scmp.ne.s32.totalorder %s23, %s24
    %p35 = scmp.eq.s32.totalorder %s15, 0
    %p36 = por %p34, %p35
    %p37 = scmp.ne.s32.totalorder %s23, %s24
    %p38 = scmp.eq.s32.totalorder %s16, 1
    %p39 = por %p37, %p38
    %p41 = scmp.ne.s32.totalorder %s24, %s40
    %p42 = scmp.eq.s32.totalorder %s16, 0
    %p43 = por %p41, %p42
    %s45 = sadd.s32 %s44, 1
    %p48 = scmp.eq.s32.totalorder %s10, 1
    %p49 = scmp.ne.s32.totalorder %s44, %s46
    %p50 = scmp.eq.s32.totalorder %s10, 0
    %p51 = por %p49, %p50
    %p52 = scmp.ne.s32.totalorder %s44, %s46
    %p53 = scmp.eq.s32.totalorder %s15, 1
    %p54 = por %p52, %p53
    %p55 = scmp.ne.s32.totalorder %s46, %s47
    %p56 = scmp.eq.s32.totalorder %s15, 0
    %p57 = por %p55, %p56
    %p58 = scmp.ne.s32.totalorder %s46, %s47
    %p59 = scmp.eq.s32.totalorder %s16, 1
    %p60 = por %p58, %p59
    %p62 = scmp.ne.s32.totalorder %s47, %s61
    %p63 = scmp.eq.s32.totalorder %s16, 0
    %p64 = por %p62, %p63
    %s65 = ssub.s32 %s10, %s17
    %p66 = scmp.eq.s32.totalorder %s65, 0
    %s68 = sadd.s32 %s67, 1
    %s69 = scalar_select %p66, %s67, %s68
    %p72 = pneg %p66
    %p73 = scmp.eq.s32.totalorder %s10, 1
    %p74 = por %p72, %p73
    %p75 = scmp.ne.s32.totalorder %s67, %s70
    %p76 = scmp.eq.s32.totalorder %s10, 0
    %p77 = por %p75, %p76
    %p78 = scmp.ne.s32.totalorder %s67, %s70
    %p79 = scmp.eq.s32.totalorder %s15, 1
    %p80 = por %p78, %p79
    %p81 = scmp.ne.s32.totalorder %s70, %s71
    %p82 = scmp.eq.s32.totalorder %s15, 0
    %p83 = por %p81, %p82
    %p84 = scmp.ne.s32.totalorder %s70, %s71
    %p85 = scmp.eq.s32.totalorder %s16, 1
    %p86 = por %p84, %p85
    %p88 = scmp.ne.s32.totalorder %s71, %s87
    %p89 = scmp.eq.s32.totalorder %s16, 0
    %p90 = por %p88, %p89
    %s91 = ssub.s32 %s10, %s17
    %p92 = scmp.eq.s32.totalorder %s91, 0
    %s94 = sadd.s32 %s93, 1
    %s95 = scalar_select %p92, %s93, %s94
    %p98 = pneg %p92
    %p99 = scmp.eq.s32.totalorder %s10, 1
    %p100 = por %p98, %p99
    %p101 = scmp.ne.s32.totalorder %s93, %s96
    %p102 = scmp.eq.s32.totalorder %s10, 0
    %p103 = por %p101, %p102
    %p104 = scmp.ne.s32.totalorder %s93, %s96
    %p105 = scmp.eq.s32.totalorder %s15, 1
    %p106 = por %p104, %p105
    %p107 = scmp.ne.s32.totalorder %s96, %s97
    %p108 = scmp.eq.s32.totalorder %s15, 0
    %p109 = por %p107, %p108
    %p110 = scmp.ne.s32.totalorder %s96, %s97
    %p111 = scmp.eq.s32.totalorder %s16, 1
    %p112 = por %p110, %p111
    %p114 = scmp.ne.s32.totalorder %s97, %s113
    %p115 = scmp.eq.s32.totalorder %s16, 0
    %p116 = por %p114, %p115
    %p117 = scmp.le.s32.totalorder 1, %s10
    %p118 = scmp.lt.s32.totalorder %s10, 3
    %p119 = pnand %p117, %p118
    %p120 = pneg %p119
    // Predicated region
    $region9: #{conv_layer_forward.2} parent=5 // pred_check
      _
    $region10: #{conv_layer_forward.2} parent=5 // pred_check_branch
      %122 = sbr.rel (%p119) target = $region12
    $region11: #{conv_layer_forward.2} parent=5 // pred_region
      %s123 = ssub.s32 %s10, 1
      // Predicated region
      $region13: #{conv_layer_forward.2} parent=11 // pred_check
        %p124 = pneg %p57
      $region14: #{conv_layer_forward.2} parent=11 // pred_check_branch
        %126 = sbr.rel (%p124) target = $region16
      $region15: #{conv_layer_forward.2} parent=11 // pred_region
        _
      $region16: #{conv_layer_forward.2} parent=11 // pred_fallthru
        _
    $region12: #{conv_layer_forward.2} parent=5 // pred_fallthru
      _
    %p127 = scmp.lt.s32.totalorder %s10, 2
    // Predicated region
    $region17: #{conv_layer_forward.2} parent=5 // pred_check
      %p128 = pneg %p127
    $region18: #{conv_layer_forward.2} parent=5 // pred_check_branch
      %130 = sbr.rel (%p128) target = $region20
    $region19: #{conv_layer_forward.2} parent=5 // pred_region
      // Predicated region
      $region21: #{conv_layer_forward.2} parent=19 // pred_check
        %p131 = pneg %p30
      $region22: #{conv_layer_forward.2} parent=19 // pred_check_branch
        %133 = sbr.rel (%p131) target = $region24
      $region23: #{conv_layer_forward.2} parent=19 // pred_region
        %p134 = scmp.lt.s32.totalorder %s10, 1
        %s135 = scalar_select %p134, %s10, 1
        %s136 = smul.addr %s135, 18
        %s137 = smul.addr %s136, 4
        %s138 = scalar_lea.vmem %s0, %s137
      $region24: #{conv_layer_forward.2} parent=19 // pred_fallthru
        _
    $region20: #{conv_layer_forward.2} parent=5 // pred_fallthru
      _
    %p139 = scmp.le.s32.totalorder 1, %s10
    %p140 = scmp.lt.s32.totalorder %s10, 3
    %p141 = pnand %p139, %p140
    %p142 = pneg %p141
    // Predicated region
    $region25: #{conv_layer_forward.2} parent=5 // pred_check
      _
    $region26: #{conv_layer_forward.2} parent=5 // pred_check_branch
      %144 = sbr.rel (%p141) target = $region28
    $region27: #{conv_layer_forward.2} parent=5 // pred_region
      %s145 = ssub.s32 %s10, 1
      %p146 = scmp.lt.s32.totalorder %s15, 1
      %s147 = scalar_select %p146, %s15, 1
      %s148 = smul.addr %s147, 18
      %s149 = smul.addr %s148, 4
      %s150 = scalar_lea.vmem %s0, %s149
      %p151 = pneg %p36
      %p152 = pneg %p33
      %p153 = pneg %p57
      %p154 = pneg %p54
      %p155 = pneg %p83
      %p156 = pneg %p80
      %p157 = scmp.lt.s32.totalorder %s15, 1
      %s158 = scalar_select %p157, %s15, 1
      %s159 = smul.addr %s158, 8
      %s160 = smul.addr %s159, 4
      %s161 = scalar_lea.vmem %s2, %s160
      %p162 = pneg %p109
      %p163 = pneg %p106
      %p164 = scmp.lt.s32.totalorder %s15, 1
      %s165 = scalar_select %p164, %s15, 1
      %s166 = smul.addr %s165, 8
      %s167 = scalar_lea.vmem %s3, %s166
      %p168 = scmp.lt.s32.totalorder %s15, 1
      %s169 = scalar_select %p168, %s15, 1
      %s170 = smul.addr %s169, 18
      %s171 = smul.addr %s170, 4
      %s172 = scalar_lea.vmem %s0, %s171
      %p173 = scmp.lt.s32.totalorder %s15, 1
      %s174 = scalar_select %p173, %s15, 1
      %s175 = smul.addr %s174, 8
      %s176 = smul.addr %s175, 4
      %s177 = scalar_lea.vmem %s2, %s176
      %p178 = scmp.lt.s32.totalorder %s15, 1
      %s179 = scalar_select %p178, %s15, 1
      %s180 = smul.addr %s179, 8
      %s181 = scalar_lea.vmem %s3, %s180
      %v183 = vld [vmem:[%s172] sm:$0xf]
      %v184 = vld [vmem:[%s172 + $0x8] sm:$0xf]
      %v185 = vld [vmem:[%s172 + $0x10] sm:$0xf]
      %v186 = vld [vmem:[%s172 + $0x18] sm:$0xf]
      %v187 = vld [vmem:[%s172 + $0x20] sm:$0xf]
      %v188 = vld [vmem:[%s172 + $0x28] sm:$0xf]
      %v189 = vld [vmem:[%s172 + $0x30] sm:$0xf]
      %v190 = vld [vmem:[%s172 + $0x38] sm:$0xf]
      %v191 = vld [vmem:[%s1] sm:$0xf]
      %v192 = vld [vmem:[%s1 + $0x4] sm:$0xf]
      %v193 = vld [vmem:[%s172 + $0x4] sm:$0x1]
      %v194 = vld [vmem:[%s172 + $0xc] sm:$0x1]
      %v195 = vld [vmem:[%s172 + $0x14] sm:$0x1]
      %v196 = vld [vmem:[%s172 + $0x1c] sm:$0x1]
      %v197 = vld [vmem:[%s172 + $0x24] sm:$0x1]
      %v198 = vld [vmem:[%s172 + $0x2c] sm:$0x1]
      %v199 = vld [vmem:[%s172 + $0x34] sm:$0x1]
      %v200 = vld [vmem:[%s172 + $0x3c] sm:$0x1]
      %vm201 = vsmask.f32 3328
      %vm202 = vsmask.f32 7440
      %vm203 = vmor %vm201, %vm202
      %v205 = vshrl.u32 %v183, 16
      %v207 = vrot.slane %v205, 4
      %v208 = vshll.u32 %v183, 16
      %v210 = vrot.slane %v208, 5
      %v211 = vor.u32 %v207, %v210
      %v212 = vrot.slane %v211, 4
      %v214 = vshll.u32 %v193, 16
      %v216 = vrot.slane %v214, 5
      %v217 = vsel %vm203, %v212, %v216
      %v219 = vshrl.u32 %v184, 16
      %v221 = vrot.slane %v219, 4
      %v222 = vshll.u32 %v184, 16
      %v224 = vrot.slane %v222, 5
      %v225 = vor.u32 %v221, %v224
      %v226 = vrot.slane %v225, 4
      %v228 = vshll.u32 %v194, 16
      %v230 = vrot.slane %v228, 5
      %v231 = vsel %vm203, %v226, %v230
      %v233 = vshrl.u32 %v185, 16
      %v235 = vrot.slane %v233, 4
      %v236 = vshll.u32 %v185, 16
      %v238 = vrot.slane %v236, 5
      %v239 = vor.u32 %v235, %v238
      %v240 = vrot.slane %v239, 4
      %v242 = vshll.u32 %v195, 16
      %v244 = vrot.slane %v242, 5
      %v245 = vsel %vm203, %v240, %v244
      %v247 = vshrl.u32 %v186, 16
      %v249 = vrot.slane %v247, 4
      %v250 = vshll.u32 %v186, 16
      %v252 = vrot.slane %v250, 5
      %v253 = vor.u32 %v249, %v252
      %v254 = vrot.slane %v253, 4
      %v256 = vshll.u32 %v196, 16
      %v258 = vrot.slane %v256, 5
      %v259 = vsel %vm203, %v254, %v258
      %v261 = vshrl.u32 %v187, 16
      %v263 = vrot.slane %v261, 4
      %v264 = vshll.u32 %v187, 16
      %v266 = vrot.slane %v264, 5
      %v267 = vor.u32 %v263, %v266
      %v268 = vrot.slane %v267, 4
      %v270 = vshll.u32 %v197, 16
      %v272 = vrot.slane %v270, 5
      %v273 = vsel %vm203, %v268, %v272
      %v275 = vshrl.u32 %v188, 16
      %v277 = vrot.slane %v275, 4
      %v278 = vshll.u32 %v188, 16
      %v280 = vrot.slane %v278, 5
      %v281 = vor.u32 %v277, %v280
      %v282 = vrot.slane %v281, 4
      %v284 = vshll.u32 %v198, 16
      %v286 = vrot.slane %v284, 5
      %v287 = vsel %vm203, %v282, %v286
      %v289 = vshrl.u32 %v189, 16
      %v291 = vrot.slane %v289, 4
      %v292 = vshll.u32 %v189, 16
      %v294 = vrot.slane %v292, 5
      %v295 = vor.u32 %v291, %v294
      %v296 = vrot.slane %v295, 4
      %v298 = vshll.u32 %v199, 16
      %v300 = vrot.slane %v298, 5
      %v301 = vsel %vm203, %v296, %v300
      %v303 = vshrl.u32 %v190, 16
      %v305 = vrot.slane %v303, 4
      %v306 = vshll.u32 %v190, 16
      %v308 = vrot.slane %v306, 5
      %v309 = vor.u32 %v305, %v308
      %v310 = vrot.slane %v309, 4
      %v312 = vshll.u32 %v200, 16
      %v314 = vrot.slane %v312, 5
      %v315 = vsel %vm203, %v310, %v314
      %s316 = scalar_lea.vmem %s1, 8
      %v317 = vld [vmem:[%s316] sm:$0xf]
      %v318 = vld [vmem:[%s316 + $0x4] sm:$0xf]
      %v319 = vunpack.c.l.b16 %v217
      %v320 = vunpack.c.l.b16 %v231
      %v321 = vunpack.c.l.b16 %v245
      %v322 = vunpack.c.l.b16 %v259
      %v323 = vunpack.c.l.b16 %v273
      %v324 = vunpack.c.l.b16 %v287
      %v325 = vunpack.c.l.b16 %v301
      %v326 = vunpack.c.l.b16 %v315
      %v327 = vpack.c.b16 %v320, %v319
      %v328 = vpack.c.b16 %v322, %v321
      %v329 = vpack.c.b16 %v324, %v323
      %v330 = vpack.c.b16 %v326, %v325
      %v333 = vunpack.c.l.b16 %v317
      %v334 = vunpack.c.l.b16 %v318
      %v335 = vpack.c.b16 %v334, %v333
      %vm337 = vcmask 130048
      %v339 = vsel %vm337, %v327, 0
      %v342 = vsel %vm337, %v328, 0
      %v345 = vsel %vm337, %v329, 0
      %v348 = vsel %vm337, %v330, 0
      %350 = vmatprep.subr.bf16.mxu0 0
      %351 = vmatpush1.bf16.msra.mxu0 %v335
      %352 = vmatprep.subr.bf16.mxu0 0
      %353 = vmatpush1.bf16.msra.mxu0 0
      %354 = vmatprep.subr.bf16.mxu0 0
      %355 = vmatpush1.bf16.msra.mxu0 0
      %356 = vmatprep.subr.bf16.mxu0 0
      %357 = vmatpush1.bf16.msra.mxu0 0
      %358 = vmatprep.subr.bf16.mxu0 0
      %359 = vmatpush1.bf16.msra.mxu0 0
      %360 = vmatprep.subr.bf16.mxu0 0
      %361 = vmatpush1.bf16.msra.mxu0 0
      %362 = vmatprep.subr.bf16.mxu0 0
      %363 = vmatpush1.bf16.msra.mxu0 0
      %364 = vmatprep.subr.bf16.mxu0 0
      %365 = vmatpush1.bf16.msra.mxu0 0
      %366 = vmatprep.subr.bf16.mxu0 0
      %367 = vmatpush1.bf16.msra.mxu0 0
      %368 = vmatprep.subr.bf16.mxu0 0
      %369 = vmatpush1.bf16.msra.mxu0 0
      %370 = vmatprep.subr.bf16.mxu0 0
      %371 = vmatpush1.bf16.msra.mxu0 0
      %372 = vmatprep.subr.bf16.mxu0 0
      %373 = vmatpush1.bf16.msra.mxu0 0
      %374 = vmatprep.subr.bf16.mxu0 0
      %375 = vmatpush1.bf16.msra.mxu0 0
      %376 = vmatprep.subr.bf16.mxu0 0
      %377 = vmatpush1.bf16.msra.mxu0 0
      %378 = vmatprep.subr.bf16.mxu0 0
      %379 = vmatpush1.bf16.msra.mxu0 0
      %380 = vmatprep.subr.bf16.mxu0 0
      %381 = vmatpush1.bf16.msra.mxu0 0
      %382 = vmatprep.mubr.bf16.mxu0 0
      %383 = vmatmul.mubr.bf16.gmra.mrb[0].mxu0 %v339
      %v384 = vpop.f32.mrb[0].mxu0
      %v385 = vadd.f32 0.0, %v384
      %v386 = vpop.f32.mrb[0].mxu0
      %v387 = vpop.f32.mrb[0].mxu0
      %v388 = vadd.f32 0.0, %v387
      %v389 = vpop.f32.mrb[0].mxu0
      %390 = vmatprep.mubr.bf16.mxu0 0
      %391 = vmatmul.mubr.bf16.gmra.mrb[0].mxu0 %v342
      %v392 = vpop.f32.mrb[0].mxu0
      %v393 = vadd.f32 0.0, %v392
      %v394 = vpop.f32.mrb[0].mxu0
      %v395 = vpop.f32.mrb[0].mxu0
      %v396 = vadd.f32 0.0, %v395
      %v397 = vpop.f32.mrb[0].mxu0
      %398 = vmatprep.mubr.bf16.mxu0 0
      %399 = vmatmul.mubr.bf16.gmra.mrb[0].mxu0 %v345
      %v400 = vpop.f32.mrb[0].mxu0
      %v401 = vadd.f32 0.0, %v400
      %v402 = vpop.f32.mrb[0].mxu0
      %v403 = vpop.f32.mrb[0].mxu0
      %v404 = vadd.f32 0.0, %v403
      %v405 = vpop.f32.mrb[0].mxu0
      %406 = vmatprep.mubr.bf16.mxu0 0
      %407 = vmatmul.mubr.bf16.gmra.mrb[0].mxu0 %v348
      %v408 = vpop.f32.mrb[0].mxu0
      %v409 = vadd.f32 0.0, %v408
      %v410 = vpop.f32.mrb[0].mxu0
      %v411 = vpop.f32.mrb[0].mxu0
      %v412 = vadd.f32 0.0, %v411
      %v413 = vpop.f32.mrb[0].mxu0
      %414 = vdwg.mxu0
      %v423 = vunpack.c.l.b16 %v183
      %v424 = vunpack.c.l.b16 %v184
      %v425 = vunpack.c.l.b16 %v185
      %v426 = vunpack.c.l.b16 %v186
      %v427 = vunpack.c.l.b16 %v187
      %v428 = vunpack.c.l.b16 %v188
      %v429 = vunpack.c.l.b16 %v189
      %v430 = vunpack.c.l.b16 %v190
      %v431 = vpack.c.b16 %v424, %v423
      %v432 = vpack.c.b16 %v426, %v425
      %v433 = vpack.c.b16 %v428, %v427
      %v434 = vpack.c.b16 %v430, %v429
      %v437 = vunpack.c.l.b16 %v191
      %v438 = vunpack.c.l.b16 %v192
      %v439 = vpack.c.b16 %v438, %v437
      %v442 = vsel %vm337, %v431, 0
      %v445 = vsel %vm337, %v432, 0
      %v448 = vsel %vm337, %v433, 0
      %v451 = vsel %vm337, %v434, 0
      %453 = vmatprep.subr.bf16.mxu0 0
      %454 = vmatpush1.bf16.msra.mxu0 %v439
      %455 = vmatprep.subr.bf16.mxu0 0
      %456 = vmatpush1.bf16.msra.mxu0 0
      %457 = vmatprep.subr.bf16.mxu0 0
      %458 = vmatpush1.bf16.msra.mxu0 0
      %459 = vmatprep.subr.bf16.mxu0 0
      %460 = vmatpush1.bf16.msra.mxu0 0
      %461 = vmatprep.subr.bf16.mxu0 0
      %462 = vmatpush1.bf16.msra.mxu0 0
      %463 = vmatprep.subr.bf16.mxu0 0
      %464 = vmatpush1.bf16.msra.mxu0 0
      %465 = vmatprep.subr.bf16.mxu0 0
      %466 = vmatpush1.bf16.msra.mxu0 0
      %467 = vmatprep.subr.bf16.mxu0 0
      %468 = vmatpush1.bf16.msra.mxu0 0
      %469 = vmatprep.subr.bf16.mxu0 0
      %470 = vmatpush1.bf16.msra.mxu0 0
      %471 = vmatprep.subr.bf16.mxu0 0
      %472 = vmatpush1.bf16.msra.mxu0 0
      %473 = vmatprep.subr.bf16.mxu0 0
      %474 = vmatpush1.bf16.msra.mxu0 0
      %475 = vmatprep.subr.bf16.mxu0 0
      %476 = vmatpush1.bf16.msra.mxu0 0
      %477 = vmatprep.subr.bf16.mxu0 0
      %478 = vmatpush1.bf16.msra.mxu0 0
      %479 = vmatprep.subr.bf16.mxu0 0
      %480 = vmatpush1.bf16.msra.mxu0 0
      %481 = vmatprep.subr.bf16.mxu0 0
      %482 = vmatpush1.bf16.msra.mxu0 0
      %483 = vmatprep.subr.bf16.mxu0 0
      %484 = vmatpush1.bf16.msra.mxu0 0
      %485 = vmatprep.mubr.bf16.mxu0 0
      %486 = vmatmul.mubr.bf16.gmra.mrb[0].mxu0 %v442
      %v487 = vpop.f32.mrb[0].mxu0
      %v488 = vadd.f32 %v385, %v487
      %v489 = vpop.f32.mrb[0].mxu0
      %v490 = vpop.f32.mrb[0].mxu0
      %v491 = vadd.f32 %v388, %v490
      %v492 = vpop.f32.mrb[0].mxu0
      %493 = vmatprep.mubr.bf16.mxu0 0
      %494 = vmatmul.mubr.bf16.gmra.mrb[0].mxu0 %v445
      %v495 = vpop.f32.mrb[0].mxu0
      %v496 = vadd.f32 %v393, %v495
      %v497 = vpop.f32.mrb[0].mxu0
      %v498 = vpop.f32.mrb[0].mxu0
      %v499 = vadd.f32 %v396, %v498
      %v500 = vpop.f32.mrb[0].mxu0
      %501 = vmatprep.mubr.bf16.mxu0 0
      %502 = vmatmul.mubr.bf16.gmra.mrb[0].mxu0 %v448
      %v503 = vpop.f32.mrb[0].mxu0
      %v504 = vadd.f32 %v401, %v503
      %v505 = vpop.f32.mrb[0].mxu0
      %v506 = vpop.f32.mrb[0].mxu0
      %v507 = vadd.f32 %v404, %v506
      %v508 = vpop.f32.mrb[0].mxu0
      %509 = vmatprep.mubr.bf16.mxu0 0
      %510 = vmatmul.mubr.bf16.gmra.mrb[0].mxu0 %v451
      %v511 = vpop.f32.mrb[0].mxu0
      %v512 = vadd.f32 %v409, %v511
      %v513 = vpop.f32.mrb[0].mxu0
      %v514 = vpop.f32.mrb[0].mxu0
      %v515 = vadd.f32 %v412, %v514
      %v516 = vpop.f32.mrb[0].mxu0
      %517 = vdwg.mxu0
      %s518 = scalar_lea.vmem %s172, 8
      %v519 = vld [vmem:[%s518] sm:$0xf]
      %v520 = vld [vmem:[%s518 + $0x8] sm:$0xf]
      %v521 = vld [vmem:[%s518 + $0x10] sm:$0xf]
      %v522 = vld [vmem:[%s518 + $0x18] sm:$0xf]
      %v523 = vld [vmem:[%s518 + $0x20] sm:$0xf]
      %v524 = vld [vmem:[%s518 + $0x28] sm:$0xf]
      %v525 = vld [vmem:[%s518 + $0x30] sm:$0xf]
      %v526 = vld [vmem:[%s518 + $0x38] sm:$0xf]
      %s527 = scalar_lea.vmem %s1, 16
      %v528 = vld [vmem:[%s527] sm:$0xf]
      %v529 = vld [vmem:[%s527 + $0x4] sm:$0xf]
      %v538 = vunpack.c.l.b16 %v519
      %v539 = vunpack.c.l.b16 %v520
      %v540 = vunpack.c.l.b16 %v521
      %v541 = vunpack.c.l.b16 %v522
      %v542 = vunpack.c.l.b16 %v523
      %v543 = vunpack.c.l.b16 %v524
      %v544 = vunpack.c.l.b16 %v525
      %v545 = vunpack.c.l.b16 %v526
      %v546 = vpack.c.b16 %v539, %v538
      %v547 = vpack.c.b16 %v541, %v540
      %v548 = vpack.c.b16 %v543, %v542
      %v549 = vpack.c.b16 %v545, %v544
      %v552 = vunpack.c.l.b16 %v528
      %v553 = vunpack.c.l.b16 %v529
      %v554 = vpack.c.b16 %v553, %v552
      %v557 = vsel %vm337, %v546, 0
      %v560 = vsel %vm337, %v547, 0
      %v563 = vsel %vm337, %v548, 0
      %v566 = vsel %vm337, %v549, 0
      %568 = vmatprep.subr.bf16.mxu0 0
      %569 = vmatpush1.bf16.msra.mxu0 %v554
      %570 = vmatprep.subr.bf16.mxu0 0
      %571 = vmatpush1.bf16.msra.mxu0 0
      %572 = vmatprep.subr.bf16.mxu0 0
      %573 = vmatpush1.bf16.msra.mxu0 0
      %574 = vmatprep.subr.bf16.mxu0 0
      %575 = vmatpush1.bf16.msra.mxu0 0
      %576 = vmatprep.subr.bf16.mxu0 0
      %577 = vmatpush1.bf16.msra.mxu0 0
      %578 = vmatprep.subr.bf16.mxu0 0
      %579 = vmatpush1.bf16.msra.mxu0 0
      %580 = vmatprep.subr.bf16.mxu0 0
      %581 = vmatpush1.bf16.msra.mxu0 0
      %582 = vmatprep.subr.bf16.mxu0 0
      %583 = vmatpush1.bf16.msra.mxu0 0
      %584 = vmatprep.subr.bf16.mxu0 0
      %585 = vmatpush1.bf16.msra.mxu0 0
      %586 = vmatprep.subr.bf16.mxu0 0
      %587 = vmatpush1.bf16.msra.mxu0 0
      %588 = vmatprep.subr.bf16.mxu0 0
      %589 = vmatpush1.bf16.msra.mxu0 0
      %590 = vmatprep.subr.bf16.mxu0 0
      %591 = vmatpush1.bf16.msra.mxu0 0
      %592 = vmatprep.subr.bf16.mxu0 0
      %593 = vmatpush1.bf16.msra.mxu0 0
      %594 = vmatprep.subr.bf16.mxu0 0
      %595 = vmatpush1.bf16.msra.mxu0 0
      %596 = vmatprep.subr.bf16.mxu0 0
      %597 = vmatpush1.bf16.msra.mxu0 0
      %598 = vmatprep.subr.bf16.mxu0 0
      %599 = vmatpush1.bf16.msra.mxu0 0
      %600 = vmatprep.mubr.bf16.mxu0 0
      %601 = vmatmul.mubr.bf16.gmra.mrb[0].mxu0 %v557
      %v602 = vpop.f32.mrb[0].mxu0
      %v603 = vadd.f32 0.0, %v602
      %v604 = vpop.f32.mrb[0].mxu0
      %v605 = vpop.f32.mrb[0].mxu0
      %v606 = vadd.f32 0.0, %v605
      %v607 = vpop.f32.mrb[0].mxu0
      %608 = vmatprep.mubr.bf16.mxu0 0
      %609 = vmatmul.mubr.bf16.gmra.mrb[0].mxu0 %v560
      %v610 = vpop.f32.mrb[0].mxu0
      %v611 = vadd.f32 0.0, %v610
      %v612 = vpop.f32.mrb[0].mxu0
      %v613 = vpop.f32.mrb[0].mxu0
      %v614 = vadd.f32 0.0, %v613
      %v615 = vpop.f32.mrb[0].mxu0
      %616 = vmatprep.mubr.bf16.mxu0 0
      %617 = vmatmul.mubr.bf16.gmra.mrb[0].mxu0 %v563
      %v618 = vpop.f32.mrb[0].mxu0
      %v619 = vadd.f32 0.0, %v618
      %v620 = vpop.f32.mrb[0].mxu0
      %v621 = vpop.f32.mrb[0].mxu0
      %v622 = vadd.f32 0.0, %v621
      %v623 = vpop.f32.mrb[0].mxu0
      %624 = vmatprep.mubr.bf16.mxu0 0
      %625 = vmatmul.mubr.bf16.gmra.mrb[0].mxu0 %v566
      %v626 = vpop.f32.mrb[0].mxu0
      %v627 = vadd.f32 0.0, %v626
      %v628 = vpop.f32.mrb[0].mxu0
      %v629 = vpop.f32.mrb[0].mxu0
      %v630 = vadd.f32 0.0, %v629
      %v631 = vpop.f32.mrb[0].mxu0
      %632 = vdwg.mxu0
      %v633 = vadd.f32 %v488, %v603
      %v634 = vadd.f32 %v491, %v606
      %v635 = vadd.f32 %v496, %v611
      %v636 = vadd.f32 %v499, %v614
      %v637 = vadd.f32 %v504, %v619
      %v638 = vadd.f32 %v507, %v622
      %v639 = vadd.f32 %v512, %v627
      %v640 = vadd.f32 %v515, %v630
      %v641 = vld [vmem:[%s518] sm:$0xf]
      %v642 = vld [vmem:[%s518 + $0x4] sm:$0x1]
      %v643 = vld [vmem:[%s518 + $0x8] sm:$0xf]
      %v644 = vld [vmem:[%s518 + $0xc] sm:$0x1]
      %v645 = vld [vmem:[%s518 + $0x10] sm:$0xf]
      %v646 = vld [vmem:[%s518 + $0x14] sm:$0x1]
      %v647 = vld [vmem:[%s518 + $0x18] sm:$0xf]
      %v648 = vld [vmem:[%s518 + $0x1c] sm:$0x1]
      %v649 = vld [vmem:[%s518 + $0x20] sm:$0xf]
      %v650 = vld [vmem:[%s518 + $0x24] sm:$0x1]
      %v651 = vld [vmem:[%s518 + $0x28] sm:$0xf]
      %v652 = vld [vmem:[%s518 + $0x2c] sm:$0x1]
      %v653 = vld [vmem:[%s518 + $0x30] sm:$0xf]
      %v654 = vld [vmem:[%s518 + $0x34] sm:$0x1]
      %v655 = vld [vmem:[%s518 + $0x38] sm:$0xf]
      %v656 = vld [vmem:[%s518 + $0x3c] sm:$0x1]
      %v658 = vshrl.u32 %v641, 16
      %v660 = vrot.slane %v658, 4
      %v661 = vshll.u32 %v641, 16
      %v663 = vrot.slane %v661, 5
      %v664 = vor.u32 %v660, %v663
      %v665 = vrot.slane %v664, 4
      %v667 = vshll.u32 %v642, 16
      %v669 = vrot.slane %v667, 5
      %v670 = vsel %vm203, %v665, %v669
      %v672 = vshrl.u32 %v643, 16
      %v674 = vrot.slane %v672, 4
      %v675 = vshll.u32 %v643, 16
      %v677 = vrot.slane %v675, 5
      %v678 = vor.u32 %v674, %v677
      %v679 = vrot.slane %v678, 4
      %v681 = vshll.u32 %v644, 16
      %v683 = vrot.slane %v681, 5
      %v684 = vsel %vm203, %v679, %v683
      %v686 = vshrl.u32 %v645, 16
      %v688 = vrot.slane %v686, 4
      %v689 = vshll.u32 %v645, 16
      %v691 = vrot.slane %v689, 5
      %v692 = vor.u32 %v688, %v691
      %v693 = vrot.slane %v692, 4
      %v695 = vshll.u32 %v646, 16
      %v697 = vrot.slane %v695, 5
      %v698 = vsel %vm203, %v693, %v697
      %v700 = vshrl.u32 %v647, 16
      %v702 = vrot.slane %v700, 4
      %v703 = vshll.u32 %v647, 16
      %v705 = vrot.slane %v703, 5
      %v706 = vor.u32 %v702, %v705
      %v707 = vrot.slane %v706, 4
      %v709 = vshll.u32 %v648, 16
      %v711 = vrot.slane %v709, 5
      %v712 = vsel %vm203, %v707, %v711
      %v714 = vshrl.u32 %v649, 16
      %v716 = vrot.slane %v714, 4
      %v717 = vshll.u32 %v649, 16
      %v719 = vrot.slane %v717, 5
      %v720 = vor.u32 %v716, %v719
      %v721 = vrot.slane %v720, 4
      %v723 = vshll.u32 %v650, 16
      %v725 = vrot.slane %v723, 5
      %v726 = vsel %vm203, %v721, %v725
      %v728 = vshrl.u32 %v651, 16
      %v730 = vrot.slane %v728, 4
      %v731 = vshll.u32 %v651, 16
      %v733 = vrot.slane %v731, 5
      %v734 = vor.u32 %v730, %v733
      %v735 = vrot.slane %v734, 4
      %v737 = vshll.u32 %v652, 16
      %v739 = vrot.slane %v737, 5
      %v740 = vsel %vm203, %v735, %v739
      %v742 = vshrl.u32 %v653, 16
      %v744 = vrot.slane %v742, 4
      %v745 = vshll.u32 %v653, 16
      %v747 = vrot.slane %v745, 5
      %v748 = vor.u32 %v744, %v747
      %v749 = vrot.slane %v748, 4
      %v751 = vshll.u32 %v654, 16
      %v753 = vrot.slane %v751, 5
      %v754 = vsel %vm203, %v749, %v753
      %v756 = vshrl.u32 %v655, 16
      %v758 = vrot.slane %v756, 4
      %v759 = vshll.u32 %v655, 16
      %v761 = vrot.slane %v759, 5
      %v762 = vor.u32 %v758, %v761
      %v763 = vrot.slane %v762, 4
      %v765 = vshll.u32 %v656, 16
      %v767 = vrot.slane %v765, 5
      %v768 = vsel %vm203, %v763, %v767
      %s769 = scalar_lea.vmem %s1, 24
      %v770 = vld [vmem:[%s769] sm:$0xf]
      %v771 = vld [vmem:[%s769 + $0x4] sm:$0xf]
      %v772 = vunpack.c.l.b16 %v670
      %v773 = vunpack.c.l.b16 %v684
      %v774 = vunpack.c.l.b16 %v698
      %v775 = vunpack.c.l.b16 %v712
      %v776 = vunpack.c.l.b16 %v726
      %v777 = vunpack.c.l.b16 %v740
      %v778 = vunpack.c.l.b16 %v754
      %v779 = vunpack.c.l.b16 %v768
      %v780 = vpack.c.b16 %v773, %v772
      %v781 = vpack.c.b16 %v775, %v774
      %v782 = vpack.c.b16 %v777, %v776
      %v783 = vpack.c.b16 %v779, %v778
      %v786 = vunpack.c.l.b16 %v770
      %v787 = vunpack.c.l.b16 %v771
      %v788 = vpack.c.b16 %v787, %v786
      %v791 = vsel %vm337, %v780, 0
      %v794 = vsel %vm337, %v781, 0
      %v797 = vsel %vm337, %v782, 0
      %v800 = vsel %vm337, %v783, 0
      %802 = vmatprep.subr.bf16.mxu0 0
      %803 = vmatpush1.bf16.msra.mxu0 %v788
      %804 = vmatprep.subr.bf16.mxu0 0
      %805 = vmatpush1.bf16.msra.mxu0 0
      %806 = vmatprep.subr.bf16.mxu0 0
      %807 = vmatpush1.bf16.msra.mxu0 0
      %808 = vmatprep.subr.bf16.mxu0 0
      %809 = vmatpush1.bf16.msra.mxu0 0
      %810 = vmatprep.subr.bf16.mxu0 0
      %811 = vmatpush1.bf16.msra.mxu0 0
      %812 = vmatprep.subr.bf16.mxu0 0
      %813 = vmatpush1.bf16.msra.mxu0 0
      %814 = vmatprep.subr.bf16.mxu0 0
      %815 = vmatpush1.bf16.msra.mxu0 0
      %816 = vmatprep.subr.bf16.mxu0 0
      %817 = vmatpush1.bf16.msra.mxu0 0
      %818 = vmatprep.subr.bf16.mxu0 0
      %819 = vmatpush1.bf16.msra.mxu0 0
      %820 = vmatprep.subr.bf16.mxu0 0
      %821 = vmatpush1.bf16.msra.mxu0 0
      %822 = vmatprep.subr.bf16.mxu0 0
      %823 = vmatpush1.bf16.msra.mxu0 0
      %824 = vmatprep.subr.bf16.mxu0 0
      %825 = vmatpush1.bf16.msra.mxu0 0
      %826 = vmatprep.subr.bf16.mxu0 0
      %827 = vmatpush1.bf16.msra.mxu0 0
      %828 = vmatprep.subr.bf16.mxu0 0
      %829 = vmatpush1.bf16.msra.mxu0 0
      %830 = vmatprep.subr.bf16.mxu0 0
      %831 = vmatpush1.bf16.msra.mxu0 0
      %832 = vmatprep.subr.bf16.mxu0 0
      %833 = vmatpush1.bf16.msra.mxu0 0
      %834 = vmatprep.mubr.bf16.mxu0 0
      %835 = vmatmul.mubr.bf16.gmra.mrb[0].mxu0 %v791
      %v836 = vpop.f32.mrb[0].mxu0
      %v837 = vadd.f32 0.0, %v836
      %v838 = vpop.f32.mrb[0].mxu0
      %v839 = vpop.f32.mrb[0].mxu0
      %v840 = vadd.f32 0.0, %v839
      %v841 = vpop.f32.mrb[0].mxu0
      %842 = vmatprep.mubr.bf16.mxu0 0
      %843 = vmatmul.mubr.bf16.gmra.mrb[0].mxu0 %v794
      %v844 = vpop.f32.mrb[0].mxu0
      %v845 = vadd.f32 0.0, %v844
      %v846 = vpop.f32.mrb[0].mxu0
      %v847 = vpop.f32.mrb[0].mxu0
      %v848 = vadd.f32 0.0, %v847
      %v849 = vpop.f32.mrb[0].mxu0
      %850 = vmatprep.mubr.bf16.mxu0 0
      %851 = vmatmul.mubr.bf16.gmra.mrb[0].mxu0 %v797
      %v852 = vpop.f32.mrb[0].mxu0
      %v853 = vadd.f32 0.0, %v852
      %v854 = vpop.f32.mrb[0].mxu0
      %v855 = vpop.f32.mrb[0].mxu0
      %v856 = vadd.f32 0.0, %v855
      %v857 = vpop.f32.mrb[0].mxu0
      %858 = vmatprep.mubr.bf16.mxu0 0
      %859 = vmatmul.mubr.bf16.gmra.mrb[0].mxu0 %v800
      %v860 = vpop.f32.mrb[0].mxu0
      %v861 = vadd.f32 0.0, %v860
      %v862 = vpop.f32.mrb[0].mxu0
      %v863 = vpop.f32.mrb[0].mxu0
      %v864 = vadd.f32 0.0, %v863
      %v865 = vpop.f32.mrb[0].mxu0
      %866 = vdwg.mxu0
      %v867 = vadd.f32 %v633, %v837
      %v868 = vadd.f32 %v634, %v840
      %v869 = vadd.f32 %v635, %v845
      %v870 = vadd.f32 %v636, %v848
      %v871 = vadd.f32 %v637, %v853
      %v872 = vadd.f32 %v638, %v856
      %v873 = vadd.f32 %v639, %v861
      %v874 = vadd.f32 %v640, %v864
      %v875 = vlaneseq
      %v876 = vshrl.u32 %v875, 7
      %vm877 = vcmp.lt.s32.totalorder %v876, 8
      %v878 = vsel %vm877, 1, 0
      %vm879 = vcmp.eq.s32.totalorder %v878, 1
      %v880 = vsel %vm879, %v867, 0.0
      %v881 = vsel %vm879, %v868, 0.0
      %v882 = vsel %vm879, %v869, 0.0
      %v883 = vsel %vm879, %v870, 0.0
      %v884 = vsel %vm879, %v871, 0.0
      %v885 = vsel %vm879, %v872, 0.0
      %v886 = vsel %vm879, %v873, 0.0
      %v887 = vsel %vm879, %v874, 0.0
      %v888 = vadd.f32 %v880, %v881
      %v889 = vadd.f32 %v888, %v882
      %v890 = vadd.f32 %v889, %v883
      %v891 = vadd.f32 %v890, %v884
      %v892 = vadd.f32 %v891, %v885
      %v893 = vadd.f32 %v892, %v886
      %v894 = vadd.f32 %v893, %v887
      %v895 = vrot.slane %v894, 4
      %v896 = vadd.f32 %v894, %v895
      %v897 = vrot.slane %v896, 2
      %v898 = vadd.f32 %v896, %v897
      %v899 = vrot.slane %v898, 1
      %v900 = vadd.f32 %v898, %v899
      %v901 = vmul.f32 %v900, 0.015625
      %v902 = vsub.f32 %v867, %v901
      %v903 = vsub.f32 %v868, %v901
      %v904 = vsub.f32 %v869, %v901
      %v905 = vsub.f32 %v870, %v901
      %v906 = vsub.f32 %v871, %v901
      %v907 = vsub.f32 %v872, %v901
      %v908 = vsub.f32 %v873, %v901
      %v909 = vsub.f32 %v874, %v901
      %v910 = vsel %vm879, %v902, 0.0
      %v911 = vsel %vm879, %v903, 0.0
      %v912 = vsel %vm879, %v904, 0.0
      %v913 = vsel %vm879, %v905, 0.0
      %v914 = vsel %vm879, %v906, 0.0
      %v915 = vsel %vm879, %v907, 0.0
      %v916 = vsel %vm879, %v908, 0.0
      %v917 = vsel %vm879, %v909, 0.0
      %v918 = vmul.f32 %v910, %v910
      %v919 = vmul.f32 %v911, %v911
      %v920 = vmul.f32 %v912, %v912
      %v921 = vmul.f32 %v913, %v913
      %v922 = vmul.f32 %v914, %v914
      %v923 = vmul.f32 %v915, %v915
      %v924 = vmul.f32 %v916, %v916
      %v925 = vmul.f32 %v917, %v917
      %v926 = vadd.f32 %v918, %v919
      %v927 = vadd.f32 %v926, %v920
      %v928 = vadd.f32 %v927, %v921
      %v929 = vadd.f32 %v928, %v922
      %v930 = vadd.f32 %v929, %v923
      %v931 = vadd.f32 %v930, %v924
      %v932 = vadd.f32 %v931, %v925
      %v933 = vrot.slane %v932, 4
      %v934 = vadd.f32 %v932, %v933
      %v935 = vrot.slane %v934, 2
      %v936 = vadd.f32 %v934, %v935
      %v937 = vrot.slane %v936, 1
      %v938 = vadd.f32 %v936, %v937
      %vm939 = vcmask 1040384
      %v940 = vsel %vm939, %v900, %v938
      %vm941 = vcmask 1041408
      %v942 = vsel %vm941, %v940, 0.0
      %943 = vst [vmem:[%s181] sm:$0xff] %v942
      %v944 = vpack.c.bf16 %v868, %v867
      %v945 = vpack.c.bf16 %v870, %v869
      %v946 = vpack.c.bf16 %v872, %v871
      %v947 = vpack.c.bf16 %v874, %v873
      %v952 = vunpack.c.l.b16 %v944
      %v953 = vunpack.c.h.b16 %v944
      %v954 = vunpack.c.l.b16 %v945
      %v955 = vunpack.c.h.b16 %v945
      %v956 = vunpack.c.l.b16 %v946
      %v957 = vunpack.c.h.b16 %v946
      %v958 = vunpack.c.l.b16 %v947
      %v959 = vunpack.c.h.b16 %v947
      %v960 = vpack.c.b16 %v952, %v952
      %v961 = vpack.c.b16 %v953, %v953
      %v962 = vpack.c.b16 %v954, %v954
      %v963 = vpack.c.b16 %v955, %v955
      %v964 = vpack.c.b16 %v956, %v956
      %v965 = vpack.c.b16 %v957, %v957
      %v966 = vpack.c.b16 %v958, %v958
      %v967 = vpack.c.b16 %v959, %v959
      %976 = vst [vmem:[%s177] sm:$0xf] %v960
      %977 = vst [vmem:[%s177 + $0x4] sm:$0xf] %v961
      %978 = vst [vmem:[%s177 + $0x8] sm:$0xf] %v962
      %979 = vst [vmem:[%s177 + $0xc] sm:$0xf] %v963
      %980 = vst [vmem:[%s177 + $0x10] sm:$0xf] %v964
      %981 = vst [vmem:[%s177 + $0x14] sm:$0xf] %v965
      %982 = vst [vmem:[%s177 + $0x18] sm:$0xf] %v966
      %983 = vst [vmem:[%s177 + $0x1c] sm:$0xf] %v967
      %p984 = scmp.lt.s32.totalorder %s15, 1
      %s985 = scalar_select %p984, %s15, 1
      %s986 = smul.addr %s985, 8
      %s987 = smul.addr %s986, 4
      %s988 = scalar_lea.vmem %s2, %s987
      %p989 = scmp.lt.s32.totalorder %s15, 1
      %s990 = scalar_select %p989, %s15, 1
      %s991 = smul.addr %s990, 8
      %s992 = scalar_lea.vmem %s3, %s991
      // Predicated region
      $region29: #{conv_layer_forward.2} parent=27 // pred_check
        %p993 = pneg %p80
      $region30: #{conv_layer_forward.2} parent=27 // pred_check_branch
        %995 = sbr.rel (%p993) target = $region32
      $region31: #{conv_layer_forward.2} parent=27 // pred_region
        _
      $region32: #{conv_layer_forward.2} parent=27 // pred_fallthru
        _
      // Predicated region
      $region33: #{conv_layer_forward.2} parent=27 // pred_check
        %p996 = pneg %p106
      $region34: #{conv_layer_forward.2} parent=27 // pred_check_branch
        %998 = sbr.rel (%p996) target = $region36
      $region35: #{conv_layer_forward.2} parent=27 // pred_region
        _
      $region36: #{conv_layer_forward.2} parent=27 // pred_fallthru
        _
    $region28: #{conv_layer_forward.2} parent=5 // pred_fallthru
      _
    %p999 = scmp.le.s32.totalorder 2, %s10
    // Predicated region
    $region37: #{conv_layer_forward.2} parent=5 // pred_check
      %p1000 = pneg %p999
    $region38: #{conv_layer_forward.2} parent=5 // pred_check_branch
      %1002 = sbr.rel (%p1000) target = $region40
    $region39: #{conv_layer_forward.2} parent=5 // pred_region
      %s1003 = ssub.s32 %s10, 2
      // Predicated region
      $region41: #{conv_layer_forward.2} parent=39 // pred_check
        %p1004 = pneg %p86
      $region42: #{conv_layer_forward.2} parent=39 // pred_check_branch
        %1006 = sbr.rel (%p1004) target = $region44
      $region43: #{conv_layer_forward.2} parent=39 // pred_region
        %p1007 = scmp.lt.s32.totalorder %s16, 1
        %s1008 = scalar_select %p1007, %s16, 1
        %s1009 = smul.addr %s1008, 8
        %s1010 = smul.addr %s1009, 4
        %s1011 = scalar_lea.vmem %s2, %s1010
      $region44: #{conv_layer_forward.2} parent=39 // pred_fallthru
        _
      // Predicated region
      $region45: #{conv_layer_forward.2} parent=39 // pred_check
        %p1012 = pneg %p112
      $region46: #{conv_layer_forward.2} parent=39 // pred_check_branch
        %1014 = sbr.rel (%p1012) target = $region48
      $region47: #{conv_layer_forward.2} parent=39 // pred_region
        %p1015 = scmp.lt.s32.totalorder %s16, 1
        %s1016 = scalar_select %p1015, %s16, 1
        %s1017 = smul.addr %s1016, 8
        %s1018 = scalar_lea.vmem %s3, %s1017
      $region48: #{conv_layer_forward.2} parent=39 // pred_fallthru
        _
    $region40: #{conv_layer_forward.2} parent=5 // pred_fallthru
      _
  $region6: #{conv_layer_forward.2} parent=0 // loop_footer
    %s14 = sadd.s32 1, %s10
  $region7: #{conv_layer_forward.2} parent=0 // loop_footer_branch
    %9 = sbr.rel target = $region3
  $region8: #{conv_layer_forward.2} parent=0 // loop_exit
    _

</llo_original>
